<compile_context>
chip_gen: v7x
topology: tpu7x:2x2x1
jax: 0.10.0
libtpu: 0.0.40
codegen_flags: <defaults>
</compile_context>

<pallas_src>
import functools

import jax
import jax.numpy as jnp
from jax.experimental import pallas as pl
from jax.experimental.pallas import tpu as pltpu


# ----------------------------------------------------------------------------- kernel ---

def _lr_hyper_kernel(x_ref, w1_ref, wnt_ref, bt_ref, o_ref, *, tn, b, fin, k):
    """One grid step == TN nodes.

    x_ref  : (B, TN, Fin)  long-history rows for this node block (bf16 or f32)
    w1_ref : (Fin, K)      shared fc1 weight (resident; fc1 bias folded into bt)
    wnt_ref: (K, TN, K)    per-node hyper-FC weight, pre-transposed: wnt[k, t, j] = Wn'[t, k, j]
    bt_ref : (TN, K)       per-node folded bias: b1 @ Wn' + bn*gamma + beta     (f32)
    o_ref  : (B, TN, K)    output block (f32)
    """
    # fc1 (act_type=None -> identity): single (B*TN, Fin) @ (Fin, K) MXU matmul, f32 acc.
    x2 = x_ref[...].reshape(b * tn, fin)           # leading-dim merge: layout-trivial (tn % 16 == 0)
    h = jnp.dot(x2, w1_ref[...], preferred_element_type=jnp.float32)   # (B*TN, K), f32

    bt = bt_ref[...]                                # (TN, K) f32
    # Node-wise hyper FC as K rank-1 broadcast-FMA sweeps over all TN nodes at once (VPU).
    # No per-node matmuls, no per-node stores, no node unroll.
    for bi in range(b):
        h_b = h[bi * tn:(bi + 1) * tn, :]           # (TN, K) rows of batch element bi
        y_b = bt                                    # start from the folded bias
        for kk in range(k):
            y_b = y_b + h_b[:, kk:kk + 1] * wnt_ref[kk]   # (TN,1) bcast * dense (TN,K)
        o_ref[bi] = y_b.astype(o_ref.dtype)          # one coalesced (TN, K) store per b


# --------------------------------------------------------------------- tiling heuristics ---

def _round_up(x, m):
    return ((x + m - 1) // m) * m


def _sublane(dtype):
    return {4: 8, 2: 16, 1: 32}[jnp.dtype(dtype).itemsize]


def _tile_bytes(block_shape, dtype):
    """VMEM bytes of one pipeline buffer for `block_shape`, padding-aware.

    Last dim is rounded up to 128 lanes, second-to-last to the dtype sublane multiple;
    leading dims multiply.
    """
    shape = tuple(int(d) for d in block_shape)
    if len(shape) == 1:
        shape = (1,) + shape
    *lead, r, c = shape
    lead_n = 1
    for d in lead:
        lead_n *= d
    itemsize = jnp.dtype(dtype).itemsize
    return lead_n * _round_up(r, _sublane(dtype)) * _round_up(c, 128) * itemsize


def _step_vmem_bytes(tn, b, fin, k, x_dtype):
    x_t = _tile_bytes((b, tn, fin), x_dtype)
    w1_t = _tile_bytes((fin, k), x_dtype)
    wn_t = _tile_bytes((k, tn, k), jnp.float32)
    bt_t = _tile_bytes((tn, k), jnp.float32)
    o_t = _tile_bytes((b, tn, k), jnp.float32)      # output is always f32
    # double-buffered pipeline buffers for every stream (w1 is resident; count x2 anyway)
    return 2 * (x_t + w1_t + wn_t + bt_t + o_t)


def _vmem_budget_bytes():
    """Per-generation VMEM budget; the same value is passed to vmem_limit_bytes."""
    kind = ""
    try:
        kind = jax.devices()[0].device_kind.lower()
    except Exception:
        pass
    if "v7" in kind:                       # 64 MiB physical per TensorCore -> leave headroom
        return 44 * 1024 * 1024
    if "v6" in kind or "trillium" in kind:  # 128 MiB physical
        return 72 * 1024 * 1024
    return 32 * 1024 * 1024                # v5e / unknown: safe default


def _choose_node_block(n, b, fin, k, x_dtype, budget, row_target=512):
    """Pick TN (multiple of 16) so B*TN reaches the MXU row target within the VMEM budget."""
    tn = 16
    n_cap = min(_round_up(max(n, tn), 16), 1024)
    while (tn * 2 <= n_cap
           and b * tn < row_target
           and _step_vmem_bytes(tn * 2, b, fin, k, x_dtype) <= budget):
        tn *= 2
    return tn


# --------------------------------------------------------------------------- parameters ---

def init_params(key, history_seq_len, prediction_seq_len, num_nodes,
                input_dim, output_dim, affine=True):
    fin = history_seq_len * input_dim
    k = prediction_seq_len * output_dim
    k1, k2, k3, k4 = jax.random.split(key, 4)
    lim1 = 1.0 / (fin ** 0.5)
    lim2 = 1.0 / (k ** 0.5)
    # affine=True in torch initializes gamma=1 / beta=0, so values are identical either way.
    return dict(
        w1=jax.random.uniform(k1, (fin, k), jnp.float32, -lim1, lim1),
        b1=jax.random.uniform(k2, (1, k), jnp.float32, -lim1, lim1),
        wn=jax.random.uniform(k3, (num_nodes, k, k), jnp.float32, -lim2, lim2),
        bn=jax.random.uniform(k4, (num_nodes, 1, k), jnp.float32, -lim2, lim2),
        gamma=jnp.ones((num_nodes, 1, k), jnp.float32),
        beta=jnp.zeros((num_nodes, 1, k), jnp.float32),
    )


# ------------------------------------------------------------------------------ forward ---

def lr_hyperlearnfc_forward(params, history_data, long_history_data,
                            future_data=None, epoch=0, batch_seen=0, train=False, *,
                            prediction_seq_len, output_dim,
                            compute_dtype=jnp.bfloat16):
    # history_data / future_data / epoch / batch_seen / train are unused by the PyTorch
    # forward; kept for signature parity.
    del history_data, future_data, epoch, batch_seen, train

    B, Lh, N, Ci = long_history_data.shape
    Lp, Do = prediction_seq_len, output_dim
    fin = Lh * Ci
    k = Lp * Do

    # Host-side fold (valid because act_type=None -> no nonlinearity between fc1 and hyper):
    #   y = ((x@w1 + b1) @ wn + bn) * gamma + beta
    #     = x @ w1 @ (wn*gamma) + (b1 @ (wn*gamma) + bn*gamma + beta)
    wn_eff = params["wn"] * params["gamma"]                                     # (N, K, K)
    b_total = (jnp.einsum("ik,nkj->nij", params["b1"], wn_eff,
                          precision=jax.lax.Precision.HIGHEST)[:, 0, :]
               + params["bn"][:, 0, :] * params["gamma"][:, 0, :]
               + params["beta"][:, 0, :])                                        # (N, K)

    # torch: long_history.transpose(1,2).reshape(b, n, -1).  Single relayout pass with the
    # compute-dtype cast fused in (half-width HBM round trip when bf16).
    x_bn = jnp.transpose(long_history_data, (0, 2, 1, 3)).reshape(B, N, fin)
    x_bn = x_bn.astype(compute_dtype)

    budget = _vmem_budget_bytes()
    tn = _choose_node_block(N, B, fin, k, compute_dtype, budget)
    n_pad = _round_up(N, tn)
    if n_pad != N:
        pad = n_pad - N
        x_bn = jnp.pad(x_bn, ((0, 0), (0, pad), (0, 0)))
        wn_eff = jnp.pad(wn_eff, ((0, pad), (0, 0), (0, 0)))
        b_total = jnp.pad(b_total, ((0, pad), (0, 0)))

    # Per-node weights pre-transposed so the kernel's per-k sweep is a dense (TN, K) load.
    wn_t = jnp.transpose(wn_eff, (1, 0, 2)).astype(jnp.float32)                 # (K, N_pad, K)
    b_total = b_total.astype(jnp.float32)
    w1 = params["w1"].astype(compute_dtype)

    grid = (n_pad // tn,)
    kernel = functools.partial(_lr_hyper_kernel, tn=tn, b=B, fin=fin, k=k)

    grid_spec = pltpu.PrefetchScalarGridSpec(
        num_scalar_prefetch=0,
        grid=grid,
        in_specs=[
            pl.BlockSpec((B, tn, fin), lambda g: (0, g, 0)),   # long-history rows, node block
            pl.BlockSpec((fin, k), lambda g: (0, 0)),          # shared fc1 weight (resident)
            pl.BlockSpec((k, tn, k), lambda g: (0, g, 0)),     # per-node hyper weight (K-major)
            pl.BlockSpec((tn, k), lambda g: (g, 0)),           # per-node folded bias
        ],
        out_specs=pl.BlockSpec((B, tn, k), lambda g: (0, g, 0)),
    )

    out = pl.pallas_call(
        kernel,
        out_shape=jax.ShapeDtypeStruct((B, n_pad, k), jnp.float32),
        grid_spec=grid_spec,
        compiler_params=pltpu.CompilerParams(
            # node blocks are independent -> "parallel" lets v7x split them across its 2 TCs
            dimension_semantics=("parallel",),
            vmem_limit_bytes=int(budget),
        ),
    )(x_bn, w1, wn_t, b_total)

    # (B, N_pad, K) -> (B, N, Lp, Do) -> (B, Lp, N, Do)   (tiny tensor; single fused transpose)
    pred = out[:, :N, :].reshape(B, N, Lp, Do)
    return jnp.transpose(pred, (0, 2, 1, 3))


# ---------------------------------------------------------------------------- reference ---

def _reference(params, long_history_data, prediction_seq_len, output_dim):
    B, Lh, N, Ci = long_history_data.shape
    Lp, Do = prediction_seq_len, output_dim
    x = jnp.transpose(long_history_data, (0, 2, 1, 3)).reshape(B, N, Lh * Ci)
    h = jnp.einsum("bnf,fk->bnk", x, params["w1"],
                   precision=jax.lax.Precision.HIGHEST) + params["b1"][0]
    y = jnp.einsum("bnk,nkj->bnj", h, params["wn"],
                   precision=jax.lax.Precision.HIGHEST) + params["bn"][:, 0][None]
    y = y * params["gamma"][:, 0][None] + params["beta"][:, 0][None]
    return jnp.transpose(y.reshape(B, N, Lp, Do), (0, 2, 1, 3))


# --------------------------------------------------------------------------------- main ---

if __name__ == "__main__":
    # small shapes consistent with the module's forward
    B, Lh, Lp, N, Ci, Do = 2, 12, 8, 8, 3, 2

    key = jax.random.PRNGKey(0)
    kp, kh, kl = jax.random.split(key, 3)
    params = init_params(kp, history_seq_len=Lh, prediction_seq_len=Lp,
                         num_nodes=N, input_dim=Ci, output_dim=Do, affine=True)

    history_data = jax.random.normal(kh, (B, Lh, N, Ci), jnp.float32)       # unused by forward
    long_history_data = jax.random.normal(kl, (B, Lh, N, Ci), jnp.float32)  # (B, T, N, C)

    ref = _reference(params, long_history_data, Lp, Do)

    # f32 path: tight tolerance check.
    fwd_f32 = jax.jit(functools.partial(lr_hyperlearnfc_forward,
                                        prediction_seq_len=Lp, output_dim=Do,
                                        compute_dtype=jnp.float32))
    out_f32 = jax.block_until_ready(fwd_f32(params, history_data, long_history_data))
    assert out_f32.shape == (B, Lp, N, Do), out_f32.shape
    assert jnp.allclose(out_f32, ref, atol=1e-4, rtol=1e-4), \
        float(jnp.max(jnp.abs(out_f32 - ref)))

    # default bf16 path (production setting): looser tolerance, f32 accumulation inside.
    fwd_bf16 = jax.jit(functools.partial(lr_hyperlearnfc_forward,
                                         prediction_seq_len=Lp, output_dim=Do))
    out_bf16 = jax.block_until_ready(fwd_bf16(params, history_data, long_history_data))
    assert out_bf16.shape == (B, Lp, N, Do), out_bf16.shape
    assert jnp.allclose(out_bf16, ref, atol=5e-2, rtol=5e-2), \
        float(jnp.max(jnp.abs(out_bf16 - ref)))

    print("KERNEL_OK")
</pallas_src>

<mosaic_0001>
module attributes {stable_mosaic.version = 11 : i64} {
  func.func @_lr_hyper_kernel(%arg0: i32, %arg1: memref<2x16x36xf32, #tpu.memory_space<vmem>>, %arg2: memref<36x16xf32, #tpu.memory_space<vmem>>, %arg3: memref<16x16x16xf32, #tpu.memory_space<vmem>>, %arg4: memref<16x16xf32, #tpu.memory_space<vmem>>, %arg5: memref<2x16x16xf32, #tpu.memory_space<vmem>>) attributes {dimension_semantics = [#tpu.dimension_semantics<parallel>], iteration_bounds = array<i64: 1>, scalar_prefetch = 0 : i64, scratch_operands = 0 : i64, tpu.core_type = #tpu.core_type<tc>, window_params = [{transform_indices = @transform_0, window_bounds = array<i64: 2, 16, 36>}, {pipeline_mode = #tpu.pipeline_mode<synchronous>, transform_indices = @transform_1, window_bounds = array<i64: 36, 16>}, {transform_indices = @transform_2, window_bounds = array<i64: 16, 16, 16>}, {transform_indices = @transform_3, window_bounds = array<i64: 16, 16>}, {transform_indices = @transform_4, window_bounds = array<i64: 2, 16, 16>}]} {
    %c0 = arith.constant 0 : index
    %c0_0 = arith.constant 0 : index
    %c0_1 = arith.constant 0 : index
    %0 = vector.load %arg1[%c0, %c0_0, %c0_1] : memref<2x16x36xf32, #tpu.memory_space<vmem>>, vector<2x16x36xf32>
    %1 = vector.shape_cast %0 : vector<2x16x36xf32> to vector<32x36xf32>
    %c0_2 = arith.constant 0 : index
    %c0_3 = arith.constant 0 : index
    %2 = vector.load %arg2[%c0_2, %c0_3] : memref<36x16xf32, #tpu.memory_space<vmem>>, vector<36x16xf32>
    %cst = arith.constant dense<0.000000e+00> : vector<32x16xf32>
    %3 = tpu.matmul %1, %2, %cst {dimension_numbers = #tpu.dot_dimension_numbers<[1], [0], [0], [1], [0, 0, 1, 1], [], []>} : vector<32x36xf32>, vector<36x16xf32>, vector<32x16xf32> -> vector<32x16xf32>
    %c0_4 = arith.constant 0 : index
    %c0_5 = arith.constant 0 : index
    %4 = vector.load %arg4[%c0_4, %c0_5] : memref<16x16xf32, #tpu.memory_space<vmem>>, vector<16x16xf32>
    %5 = vector.extract_strided_slice %3 {offsets = [0, 0], sizes = [16, 16], strides = [1, 1]} : vector<32x16xf32> to vector<16x16xf32>
    %6 = vector.extract_strided_slice %5 {offsets = [0, 0], sizes = [16, 1], strides = [1, 1]} : vector<16x16xf32> to vector<16x1xf32>
    %c0_6 = arith.constant 0 : index
    %c0_7 = arith.constant 0 : index
    %c0_8 = arith.constant 0 : index
    %7 = vector.load %arg3[%c0_6, %c0_7, %c0_8] : memref<16x16x16xf32, #tpu.memory_space<vmem>>, vector<1x16x16xf32>
    %8 = vector.shape_cast %7 : vector<1x16x16xf32> to vector<16x16xf32>
    %9 = vector.broadcast %6 : vector<16x1xf32> to vector<16x16xf32>
    %10 = arith.mulf %9, %8 : vector<16x16xf32>
    %11 = arith.addf %4, %10 : vector<16x16xf32>
    %12 = vector.extract_strided_slice %5 {offsets = [0, 1], sizes = [16, 1], strides = [1, 1]} : vector<16x16xf32> to vector<16x1xf32>
    %c1 = arith.constant 1 : index
    %c0_9 = arith.constant 0 : index
    %c0_10 = arith.constant 0 : index
    %13 = vector.load %arg3[%c1, %c0_9, %c0_10] : memref<16x16x16xf32, #tpu.memory_space<vmem>>, vector<1x16x16xf32>
    %14 = vector.shape_cast %13 : vector<1x16x16xf32> to vector<16x16xf32>
    %15 = vector.broadcast %12 : vector<16x1xf32> to vector<16x16xf32>
    %16 = arith.mulf %15, %14 : vector<16x16xf32>
    %17 = arith.addf %11, %16 : vector<16x16xf32>
    %18 = vector.extract_strided_slice %5 {offsets = [0, 2], sizes = [16, 1], strides = [1, 1]} : vector<16x16xf32> to vector<16x1xf32>
    %c2 = arith.constant 2 : index
    %c0_11 = arith.constant 0 : index
    %c0_12 = arith.constant 0 : index
    %19 = vector.load %arg3[%c2, %c0_11, %c0_12] : memref<16x16x16xf32, #tpu.memory_space<vmem>>, vector<1x16x16xf32>
    %20 = vector.shape_cast %19 : vector<1x16x16xf32> to vector<16x16xf32>
    %21 = vector.broadcast %18 : vector<16x1xf32> to vector<16x16xf32>
    %22 = arith.mulf %21, %20 : vector<16x16xf32>
    %23 = arith.addf %17, %22 : vector<16x16xf32>
    %24 = vector.extract_strided_slice %5 {offsets = [0, 3], sizes = [16, 1], strides = [1, 1]} : vector<16x16xf32> to vector<16x1xf32>
    %c3 = arith.constant 3 : index
    %c0_13 = arith.constant 0 : index
    %c0_14 = arith.constant 0 : index
    %25 = vector.load %arg3[%c3, %c0_13, %c0_14] : memref<16x16x16xf32, #tpu.memory_space<vmem>>, vector<1x16x16xf32>
    %26 = vector.shape_cast %25 : vector<1x16x16xf32> to vector<16x16xf32>
    %27 = vector.broadcast %24 : vector<16x1xf32> to vector<16x16xf32>
    %28 = arith.mulf %27, %26 : vector<16x16xf32>
    %29 = arith.addf %23, %28 : vector<16x16xf32>
    %30 = vector.extract_strided_slice %5 {offsets = [0, 4], sizes = [16, 1], strides = [1, 1]} : vector<16x16xf32> to vector<16x1xf32>
    %c4 = arith.constant 4 : index
    %c0_15 = arith.constant 0 : index
    %c0_16 = arith.constant 0 : index
    %31 = vector.load %arg3[%c4, %c0_15, %c0_16] : memref<16x16x16xf32, #tpu.memory_space<vmem>>, vector<1x16x16xf32>
    %32 = vector.shape_cast %31 : vector<1x16x16xf32> to vector<16x16xf32>
    %33 = vector.broadcast %30 : vector<16x1xf32> to vector<16x16xf32>
    %34 = arith.mulf %33, %32 : vector<16x16xf32>
    %35 = arith.addf %29, %34 : vector<16x16xf32>
    %36 = vector.extract_strided_slice %5 {offsets = [0, 5], sizes = [16, 1], strides = [1, 1]} : vector<16x16xf32> to vector<16x1xf32>
    %c5 = arith.constant 5 : index
    %c0_17 = arith.constant 0 : index
    %c0_18 = arith.constant 0 : index
    %37 = vector.load %arg3[%c5, %c0_17, %c0_18] : memref<16x16x16xf32, #tpu.memory_space<vmem>>, vector<1x16x16xf32>
    %38 = vector.shape_cast %37 : vector<1x16x16xf32> to vector<16x16xf32>
    %39 = vector.broadcast %36 : vector<16x1xf32> to vector<16x16xf32>
    %40 = arith.mulf %39, %38 : vector<16x16xf32>
    %41 = arith.addf %35, %40 : vector<16x16xf32>
    %42 = vector.extract_strided_slice %5 {offsets = [0, 6], sizes = [16, 1], strides = [1, 1]} : vector<16x16xf32> to vector<16x1xf32>
    %c6 = arith.constant 6 : index
    %c0_19 = arith.constant 0 : index
    %c0_20 = arith.constant 0 : index
    %43 = vector.load %arg3[%c6, %c0_19, %c0_20] : memref<16x16x16xf32, #tpu.memory_space<vmem>>, vector<1x16x16xf32>
    %44 = vector.shape_cast %43 : vector<1x16x16xf32> to vector<16x16xf32>
    %45 = vector.broadcast %42 : vector<16x1xf32> to vector<16x16xf32>
    %46 = arith.mulf %45, %44 : vector<16x16xf32>
    %47 = arith.addf %41, %46 : vector<16x16xf32>
    %48 = vector.extract_strided_slice %5 {offsets = [0, 7], sizes = [16, 1], strides = [1, 1]} : vector<16x16xf32> to vector<16x1xf32>
    %c7 = arith.constant 7 : index
    %c0_21 = arith.constant 0 : index
    %c0_22 = arith.constant 0 : index
    %49 = vector.load %arg3[%c7, %c0_21, %c0_22] : memref<16x16x16xf32, #tpu.memory_space<vmem>>, vector<1x16x16xf32>
    %50 = vector.shape_cast %49 : vector<1x16x16xf32> to vector<16x16xf32>
    %51 = vector.broadcast %48 : vector<16x1xf32> to vector<16x16xf32>
    %52 = arith.mulf %51, %50 : vector<16x16xf32>
    %53 = arith.addf %47, %52 : vector<16x16xf32>
    %54 = vector.extract_strided_slice %5 {offsets = [0, 8], sizes = [16, 1], strides = [1, 1]} : vector<16x16xf32> to vector<16x1xf32>
    %c8 = arith.constant 8 : index
    %c0_23 = arith.constant 0 : index
    %c0_24 = arith.constant 0 : index
    %55 = vector.load %arg3[%c8, %c0_23, %c0_24] : memref<16x16x16xf32, #tpu.memory_space<vmem>>, vector<1x16x16xf32>
    %56 = vector.shape_cast %55 : vector<1x16x16xf32> to vector<16x16xf32>
    %57 = vector.broadcast %54 : vector<16x1xf32> to vector<16x16xf32>
    %58 = arith.mulf %57, %56 : vector<16x16xf32>
    %59 = arith.addf %53, %58 : vector<16x16xf32>
    %60 = vector.extract_strided_slice %5 {offsets = [0, 9], sizes = [16, 1], strides = [1, 1]} : vector<16x16xf32> to vector<16x1xf32>
    %c9 = arith.constant 9 : index
    %c0_25 = arith.constant 0 : index
    %c0_26 = arith.constant 0 : index
    %61 = vector.load %arg3[%c9, %c0_25, %c0_26] : memref<16x16x16xf32, #tpu.memory_space<vmem>>, vector<1x16x16xf32>
    %62 = vector.shape_cast %61 : vector<1x16x16xf32> to vector<16x16xf32>
    %63 = vector.broadcast %60 : vector<16x1xf32> to vector<16x16xf32>
    %64 = arith.mulf %63, %62 : vector<16x16xf32>
    %65 = arith.addf %59, %64 : vector<16x16xf32>
    %66 = vector.extract_strided_slice %5 {offsets = [0, 10], sizes = [16, 1], strides = [1, 1]} : vector<16x16xf32> to vector<16x1xf32>
    %c10 = arith.constant 10 : index
    %c0_27 = arith.constant 0 : index
    %c0_28 = arith.constant 0 : index
    %67 = vector.load %arg3[%c10, %c0_27, %c0_28] : memref<16x16x16xf32, #tpu.memory_space<vmem>>, vector<1x16x16xf32>
    %68 = vector.shape_cast %67 : vector<1x16x16xf32> to vector<16x16xf32>
    %69 = vector.broadcast %66 : vector<16x1xf32> to vector<16x16xf32>
    %70 = arith.mulf %69, %68 : vector<16x16xf32>
    %71 = arith.addf %65, %70 : vector<16x16xf32>
    %72 = vector.extract_strided_slice %5 {offsets = [0, 11], sizes = [16, 1], strides = [1, 1]} : vector<16x16xf32> to vector<16x1xf32>
    %c11 = arith.constant 11 : index
    %c0_29 = arith.constant 0 : index
    %c0_30 = arith.constant 0 : index
    %73 = vector.load %arg3[%c11, %c0_29, %c0_30] : memref<16x16x16xf32, #tpu.memory_space<vmem>>, vector<1x16x16xf32>
    %74 = vector.shape_cast %73 : vector<1x16x16xf32> to vector<16x16xf32>
    %75 = vector.broadcast %72 : vector<16x1xf32> to vector<16x16xf32>
    %76 = arith.mulf %75, %74 : vector<16x16xf32>
    %77 = arith.addf %71, %76 : vector<16x16xf32>
    %78 = vector.extract_strided_slice %5 {offsets = [0, 12], sizes = [16, 1], strides = [1, 1]} : vector<16x16xf32> to vector<16x1xf32>
    %c12 = arith.constant 12 : index
    %c0_31 = arith.constant 0 : index
    %c0_32 = arith.constant 0 : index
    %79 = vector.load %arg3[%c12, %c0_31, %c0_32] : memref<16x16x16xf32, #tpu.memory_space<vmem>>, vector<1x16x16xf32>
    %80 = vector.shape_cast %79 : vector<1x16x16xf32> to vector<16x16xf32>
    %81 = vector.broadcast %78 : vector<16x1xf32> to vector<16x16xf32>
    %82 = arith.mulf %81, %80 : vector<16x16xf32>
    %83 = arith.addf %77, %82 : vector<16x16xf32>
    %84 = vector.extract_strided_slice %5 {offsets = [0, 13], sizes = [16, 1], strides = [1, 1]} : vector<16x16xf32> to vector<16x1xf32>
    %c13 = arith.constant 13 : index
    %c0_33 = arith.constant 0 : index
    %c0_34 = arith.constant 0 : index
    %85 = vector.load %arg3[%c13, %c0_33, %c0_34] : memref<16x16x16xf32, #tpu.memory_space<vmem>>, vector<1x16x16xf32>
    %86 = vector.shape_cast %85 : vector<1x16x16xf32> to vector<16x16xf32>
    %87 = vector.broadcast %84 : vector<16x1xf32> to vector<16x16xf32>
    %88 = arith.mulf %87, %86 : vector<16x16xf32>
    %89 = arith.addf %83, %88 : vector<16x16xf32>
    %90 = vector.extract_strided_slice %5 {offsets = [0, 14], sizes = [16, 1], strides = [1, 1]} : vector<16x16xf32> to vector<16x1xf32>
    %c14 = arith.constant 14 : index
    %c0_35 = arith.constant 0 : index
    %c0_36 = arith.constant 0 : index
    %91 = vector.load %arg3[%c14, %c0_35, %c0_36] : memref<16x16x16xf32, #tpu.memory_space<vmem>>, vector<1x16x16xf32>
    %92 = vector.shape_cast %91 : vector<1x16x16xf32> to vector<16x16xf32>
    %93 = vector.broadcast %90 : vector<16x1xf32> to vector<16x16xf32>
    %94 = arith.mulf %93, %92 : vector<16x16xf32>
    %95 = arith.addf %89, %94 : vector<16x16xf32>
    %96 = vector.extract_strided_slice %5 {offsets = [0, 15], sizes = [16, 1], strides = [1, 1]} : vector<16x16xf32> to vector<16x1xf32>
    %c15 = arith.constant 15 : index
    %c0_37 = arith.constant 0 : index
    %c0_38 = arith.constant 0 : index
    %97 = vector.load %arg3[%c15, %c0_37, %c0_38] : memref<16x16x16xf32, #tpu.memory_space<vmem>>, vector<1x16x16xf32>
    %98 = vector.shape_cast %97 : vector<1x16x16xf32> to vector<16x16xf32>
    %99 = vector.broadcast %96 : vector<16x1xf32> to vector<16x16xf32>
    %100 = arith.mulf %99, %98 : vector<16x16xf32>
    %101 = arith.addf %95, %100 : vector<16x16xf32>
    %c0_39 = arith.constant 0 : index
    %c0_40 = arith.constant 0 : index
    %c0_41 = arith.constant 0 : index
    %102 = vector.load %arg5[%c0_39, %c0_40, %c0_41] : memref<2x16x16xf32, #tpu.memory_space<vmem>>, vector<1x16x16xf32>
    %103 = vector.shape_cast %102 : vector<1x16x16xf32> to vector<16x16xf32>
    %104 = vector.shape_cast %101 : vector<16x16xf32> to vector<1x16x16xf32>
    tpu.vector_store %arg5[%c0_39, %c0_40, %c0_41], %104 {strides = array<i32>} : memref<2x16x16xf32, #tpu.memory_space<vmem>>, vector<1x16x16xf32>,
    %105 = vector.extract_strided_slice %3 {offsets = [16, 0], sizes = [16, 16], strides = [1, 1]} : vector<32x16xf32> to vector<16x16xf32>
    %106 = vector.extract_strided_slice %105 {offsets = [0, 0], sizes = [16, 1], strides = [1, 1]} : vector<16x16xf32> to vector<16x1xf32>
    %c0_42 = arith.constant 0 : index
    %c0_43 = arith.constant 0 : index
    %c0_44 = arith.constant 0 : index
    %107 = vector.load %arg3[%c0_42, %c0_43, %c0_44] : memref<16x16x16xf32, #tpu.memory_space<vmem>>, vector<1x16x16xf32>
    %108 = vector.shape_cast %107 : vector<1x16x16xf32> to vector<16x16xf32>
    %109 = vector.broadcast %106 : vector<16x1xf32> to vector<16x16xf32>
    %110 = arith.mulf %109, %108 : vector<16x16xf32>
    %111 = arith.addf %4, %110 : vector<16x16xf32>
    %112 = vector.extract_strided_slice %105 {offsets = [0, 1], sizes = [16, 1], strides = [1, 1]} : vector<16x16xf32> to vector<16x1xf32>
    %c1_45 = arith.constant 1 : index
    %c0_46 = arith.constant 0 : index
    %c0_47 = arith.constant 0 : index
    %113 = vector.load %arg3[%c1_45, %c0_46, %c0_47] : memref<16x16x16xf32, #tpu.memory_space<vmem>>, vector<1x16x16xf32>
    %114 = vector.shape_cast %113 : vector<1x16x16xf32> to vector<16x16xf32>
    %115 = vector.broadcast %112 : vector<16x1xf32> to vector<16x16xf32>
    %116 = arith.mulf %115, %114 : vector<16x16xf32>
    %117 = arith.addf %111, %116 : vector<16x16xf32>
    %118 = vector.extract_strided_slice %105 {offsets = [0, 2], sizes = [16, 1], strides = [1, 1]} : vector<16x16xf32> to vector<16x1xf32>
    %c2_48 = arith.constant 2 : index
    %c0_49 = arith.constant 0 : index
    %c0_50 = arith.constant 0 : index
    %119 = vector.load %arg3[%c2_48, %c0_49, %c0_50] : memref<16x16x16xf32, #tpu.memory_space<vmem>>, vector<1x16x16xf32>
    %120 = vector.shape_cast %119 : vector<1x16x16xf32> to vector<16x16xf32>
    %121 = vector.broadcast %118 : vector<16x1xf32> to vector<16x16xf32>
    %122 = arith.mulf %121, %120 : vector<16x16xf32>
    %123 = arith.addf %117, %122 : vector<16x16xf32>
    %124 = vector.extract_strided_slice %105 {offsets = [0, 3], sizes = [16, 1], strides = [1, 1]} : vector<16x16xf32> to vector<16x1xf32>
    %c3_51 = arith.constant 3 : index
    %c0_52 = arith.constant 0 : index
    %c0_53 = arith.constant 0 : index
    %125 = vector.load %arg3[%c3_51, %c0_52, %c0_53] : memref<16x16x16xf32, #tpu.memory_space<vmem>>, vector<1x16x16xf32>
    %126 = vector.shape_cast %125 : vector<1x16x16xf32> to vector<16x16xf32>
    %127 = vector.broadcast %124 : vector<16x1xf32> to vector<16x16xf32>
    %128 = arith.mulf %127, %126 : vector<16x16xf32>
    %129 = arith.addf %123, %128 : vector<16x16xf32>
    %130 = vector.extract_strided_slice %105 {offsets = [0, 4], sizes = [16, 1], strides = [1, 1]} : vector<16x16xf32> to vector<16x1xf32>
    %c4_54 = arith.constant 4 : index
    %c0_55 = arith.constant 0 : index
    %c0_56 = arith.constant 0 : index
    %131 = vector.load %arg3[%c4_54, %c0_55, %c0_56] : memref<16x16x16xf32, #tpu.memory_space<vmem>>, vector<1x16x16xf32>
    %132 = vector.shape_cast %131 : vector<1x16x16xf32> to vector<16x16xf32>
    %133 = vector.broadcast %130 : vector<16x1xf32> to vector<16x16xf32>
    %134 = arith.mulf %133, %132 : vector<16x16xf32>
    %135 = arith.addf %129, %134 : vector<16x16xf32>
    %136 = vector.extract_strided_slice %105 {offsets = [0, 5], sizes = [16, 1], strides = [1, 1]} : vector<16x16xf32> to vector<16x1xf32>
    %c5_57 = arith.constant 5 : index
    %c0_58 = arith.constant 0 : index
    %c0_59 = arith.constant 0 : index
    %137 = vector.load %arg3[%c5_57, %c0_58, %c0_59] : memref<16x16x16xf32, #tpu.memory_space<vmem>>, vector<1x16x16xf32>
    %138 = vector.shape_cast %137 : vector<1x16x16xf32> to vector<16x16xf32>
    %139 = vector.broadcast %136 : vector<16x1xf32> to vector<16x16xf32>
    %140 = arith.mulf %139, %138 : vector<16x16xf32>
    %141 = arith.addf %135, %140 : vector<16x16xf32>
    %142 = vector.extract_strided_slice %105 {offsets = [0, 6], sizes = [16, 1], strides = [1, 1]} : vector<16x16xf32> to vector<16x1xf32>
    %c6_60 = arith.constant 6 : index
    %c0_61 = arith.constant 0 : index
    %c0_62 = arith.constant 0 : index
    %143 = vector.load %arg3[%c6_60, %c0_61, %c0_62] : memref<16x16x16xf32, #tpu.memory_space<vmem>>, vector<1x16x16xf32>
    %144 = vector.shape_cast %143 : vector<1x16x16xf32> to vector<16x16xf32>
    %145 = vector.broadcast %142 : vector<16x1xf32> to vector<16x16xf32>
    %146 = arith.mulf %145, %144 : vector<16x16xf32>
    %147 = arith.addf %141, %146 : vector<16x16xf32>
    %148 = vector.extract_strided_slice %105 {offsets = [0, 7], sizes = [16, 1], strides = [1, 1]} : vector<16x16xf32> to vector<16x1xf32>
    %c7_63 = arith.constant 7 : index
    %c0_64 = arith.constant 0 : index
    %c0_65 = arith.constant 0 : index
    %149 = vector.load %arg3[%c7_63, %c0_64, %c0_65] : memref<16x16x16xf32, #tpu.memory_space<vmem>>, vector<1x16x16xf32>
    %150 = vector.shape_cast %149 : vector<1x16x16xf32> to vector<16x16xf32>
    %151 = vector.broadcast %148 : vector<16x1xf32> to vector<16x16xf32>
    %152 = arith.mulf %151, %150 : vector<16x16xf32>
    %153 = arith.addf %147, %152 : vector<16x16xf32>
    %154 = vector.extract_strided_slice %105 {offsets = [0, 8], sizes = [16, 1], strides = [1, 1]} : vector<16x16xf32> to vector<16x1xf32>
    %c8_66 = arith.constant 8 : index
    %c0_67 = arith.constant 0 : index
    %c0_68 = arith.constant 0 : index
    %155 = vector.load %arg3[%c8_66, %c0_67, %c0_68] : memref<16x16x16xf32, #tpu.memory_space<vmem>>, vector<1x16x16xf32>
    %156 = vector.shape_cast %155 : vector<1x16x16xf32> to vector<16x16xf32>
    %157 = vector.broadcast %154 : vector<16x1xf32> to vector<16x16xf32>
    %158 = arith.mulf %157, %156 : vector<16x16xf32>
    %159 = arith.addf %153, %158 : vector<16x16xf32>
    %160 = vector.extract_strided_slice %105 {offsets = [0, 9], sizes = [16, 1], strides = [1, 1]} : vector<16x16xf32> to vector<16x1xf32>
    %c9_69 = arith.constant 9 : index
    %c0_70 = arith.constant 0 : index
    %c0_71 = arith.constant 0 : index
    %161 = vector.load %arg3[%c9_69, %c0_70, %c0_71] : memref<16x16x16xf32, #tpu.memory_space<vmem>>, vector<1x16x16xf32>
    %162 = vector.shape_cast %161 : vector<1x16x16xf32> to vector<16x16xf32>
    %163 = vector.broadcast %160 : vector<16x1xf32> to vector<16x16xf32>
    %164 = arith.mulf %163, %162 : vector<16x16xf32>
    %165 = arith.addf %159, %164 : vector<16x16xf32>
    %166 = vector.extract_strided_slice %105 {offsets = [0, 10], sizes = [16, 1], strides = [1, 1]} : vector<16x16xf32> to vector<16x1xf32>
    %c10_72 = arith.constant 10 : index
    %c0_73 = arith.constant 0 : index
    %c0_74 = arith.constant 0 : index
    %167 = vector.load %arg3[%c10_72, %c0_73, %c0_74] : memref<16x16x16xf32, #tpu.memory_space<vmem>>, vector<1x16x16xf32>
    %168 = vector.shape_cast %167 : vector<1x16x16xf32> to vector<16x16xf32>
    %169 = vector.broadcast %166 : vector<16x1xf32> to vector<16x16xf32>
    %170 = arith.mulf %169, %168 : vector<16x16xf32>
    %171 = arith.addf %165, %170 : vector<16x16xf32>
    %172 = vector.extract_strided_slice %105 {offsets = [0, 11], sizes = [16, 1], strides = [1, 1]} : vector<16x16xf32> to vector<16x1xf32>
    %c11_75 = arith.constant 11 : index
    %c0_76 = arith.constant 0 : index
    %c0_77 = arith.constant 0 : index
    %173 = vector.load %arg3[%c11_75, %c0_76, %c0_77] : memref<16x16x16xf32, #tpu.memory_space<vmem>>, vector<1x16x16xf32>
    %174 = vector.shape_cast %173 : vector<1x16x16xf32> to vector<16x16xf32>
    %175 = vector.broadcast %172 : vector<16x1xf32> to vector<16x16xf32>
    %176 = arith.mulf %175, %174 : vector<16x16xf32>
    %177 = arith.addf %171, %176 : vector<16x16xf32>
    %178 = vector.extract_strided_slice %105 {offsets = [0, 12], sizes = [16, 1], strides = [1, 1]} : vector<16x16xf32> to vector<16x1xf32>
    %c12_78 = arith.constant 12 : index
    %c0_79 = arith.constant 0 : index
    %c0_80 = arith.constant 0 : index
    %179 = vector.load %arg3[%c12_78, %c0_79, %c0_80] : memref<16x16x16xf32, #tpu.memory_space<vmem>>, vector<1x16x16xf32>
    %180 = vector.shape_cast %179 : vector<1x16x16xf32> to vector<16x16xf32>
    %181 = vector.broadcast %178 : vector<16x1xf32> to vector<16x16xf32>
    %182 = arith.mulf %181, %180 : vector<16x16xf32>
    %183 = arith.addf %177, %182 : vector<16x16xf32>
    %184 = vector.extract_strided_slice %105 {offsets = [0, 13], sizes = [16, 1], strides = [1, 1]} : vector<16x16xf32> to vector<16x1xf32>
    %c13_81 = arith.constant 13 : index
    %c0_82 = arith.constant 0 : index
    %c0_83 = arith.constant 0 : index
    %185 = vector.load %arg3[%c13_81, %c0_82, %c0_83] : memref<16x16x16xf32, #tpu.memory_space<vmem>>, vector<1x16x16xf32>
    %186 = vector.shape_cast %185 : vector<1x16x16xf32> to vector<16x16xf32>
    %187 = vector.broadcast %184 : vector<16x1xf32> to vector<16x16xf32>
    %188 = arith.mulf %187, %186 : vector<16x16xf32>
    %189 = arith.addf %183, %188 : vector<16x16xf32>
    %190 = vector.extract_strided_slice %105 {offsets = [0, 14], sizes = [16, 1], strides = [1, 1]} : vector<16x16xf32> to vector<16x1xf32>
    %c14_84 = arith.constant 14 : index
    %c0_85 = arith.constant 0 : index
    %c0_86 = arith.constant 0 : index
    %191 = vector.load %arg3[%c14_84, %c0_85, %c0_86] : memref<16x16x16xf32, #tpu.memory_space<vmem>>, vector<1x16x16xf32>
    %192 = vector.shape_cast %191 : vector<1x16x16xf32> to vector<16x16xf32>
    %193 = vector.broadcast %190 : vector<16x1xf32> to vector<16x16xf32>
    %194 = arith.mulf %193, %192 : vector<16x16xf32>
    %195 = arith.addf %189, %194 : vector<16x16xf32>
    %196 = vector.extract_strided_slice %105 {offsets = [0, 15], sizes = [16, 1], strides = [1, 1]} : vector<16x16xf32> to vector<16x1xf32>
    %c15_87 = arith.constant 15 : index
    %c0_88 = arith.constant 0 : index
    %c0_89 = arith.constant 0 : index
    %197 = vector.load %arg3[%c15_87, %c0_88, %c0_89] : memref<16x16x16xf32, #tpu.memory_space<vmem>>, vector<1x16x16xf32>
    %198 = vector.shape_cast %197 : vector<1x16x16xf32> to vector<16x16xf32>
    %199 = vector.broadcast %196 : vector<16x1xf32> to vector<16x16xf32>
    %200 = arith.mulf %199, %198 : vector<16x16xf32>
    %201 = arith.addf %195, %200 : vector<16x16xf32>
    %c1_90 = arith.constant 1 : index
    %c0_91 = arith.constant 0 : index
    %c0_92 = arith.constant 0 : index
    %202 = vector.load %arg5[%c1_90, %c0_91, %c0_92] : memref<2x16x16xf32, #tpu.memory_space<vmem>>, vector<1x16x16xf32>
    %203 = vector.shape_cast %202 : vector<1x16x16xf32> to vector<16x16xf32>
    %204 = vector.shape_cast %201 : vector<16x16xf32> to vector<1x16x16xf32>
    tpu.vector_store %arg5[%c1_90, %c0_91, %c0_92], %204 {strides = array<i32>} : memref<2x16x16xf32, #tpu.memory_space<vmem>>, vector<1x16x16xf32>,
    return
  }
  func.func @transform_0(%arg0: i32) -> (i32, i32, i32) {
    %c0_i32 = arith.constant 0 : i32
    %c0_i32_0 = arith.constant 0 : i32
    %c0_i32_1 = arith.constant 0 : i32
    return %c0_i32, %arg0, %c0_i32_0 : i32, i32, i32
  }
  func.func @transform_1(%arg0: i32) -> (i32, i32) {
    %c0_i32 = arith.constant 0 : i32
    %c0_i32_0 = arith.constant 0 : i32
    %c0_i32_1 = arith.constant 0 : i32
    return %c0_i32, %c0_i32_0 : i32, i32
  }
  func.func @transform_2(%arg0: i32) -> (i32, i32, i32) {
    %c0_i32 = arith.constant 0 : i32
    %c0_i32_0 = arith.constant 0 : i32
    %c0_i32_1 = arith.constant 0 : i32
    return %c0_i32, %arg0, %c0_i32_0 : i32, i32, i32
  }
  func.func @transform_3(%arg0: i32) -> (i32, i32) {
    %c0_i32 = arith.constant 0 : i32
    %c0_i32_0 = arith.constant 0 : i32
    return %arg0, %c0_i32 : i32, i32
  }
  func.func @transform_4(%arg0: i32) -> (i32, i32, i32) {
    %c0_i32 = arith.constant 0 : i32
    %c0_i32_0 = arith.constant 0 : i32
    %c0_i32_1 = arith.constant 0 : i32
    return %c0_i32, %arg0, %c0_i32_0 : i32, i32, i32
  }
}

</mosaic_0001>

<llo_original>
// kernel: lr_hyperlearnfc_forward.1
$region0: #{lr_hyperlearnfc_forward.1}
  #allocation0 [shape = 'u32[]', space=smem, size = 0x4, offset = 0x4, fixed_abs, tag = 'smem constant byte address 0x4 - core index']
  #allocation1 [shape = 'u32[144,128]{1,0:T(1,128)}', space=vmem, size = 0x12000, scoped, tag = 'internal scratch']
  %s0 = inlined_call_operand.vmem [shape: f32[2,16,36], index: 0, kind: input, shape index: {}]
  %s1 = inlined_call_operand.vmem [shape: f32[36,16], index: 1, kind: input, shape index: {}]
  %s2 = inlined_call_operand.vmem [shape: f32[16,16,16], index: 2, kind: input, shape index: {}]
  %s3 = inlined_call_operand.vmem [shape: f32[16,16], index: 3, kind: input, shape index: {}]
  %s4 = inlined_call_operand.vmem [shape: f32[2,16,16], index: 4, kind: output, shape index: {}]
  %s5 = sld [smem:[#allocation0]]
  $region26: #{lr_hyperlearnfc_forward.1} parent=0
    _
  %s7 = ssub.s32 1, %s5
  %s8 = scalar_select 0, %s7, %s5
  // Predicated region
  $region2: #{lr_hyperlearnfc_forward.1} parent=0 // pred_check
    _
  $region3: #{lr_hyperlearnfc_forward.1} parent=0 // pred_check_branch
    %10 = sbr.rel (0) target = $region5
  $region4: #{lr_hyperlearnfc_forward.1} parent=0 // pred_region
    _
  $region5: #{lr_hyperlearnfc_forward.1} parent=0 // pred_fallthru
    _
  // Predicated region
  $region6: #{lr_hyperlearnfc_forward.1} parent=0 // pred_check
    _
  $region7: #{lr_hyperlearnfc_forward.1} parent=0 // pred_check_branch
    %12 = sbr.rel (0) target = $region9
  $region8: #{lr_hyperlearnfc_forward.1} parent=0 // pred_region
    _
  $region9: #{lr_hyperlearnfc_forward.1} parent=0 // pred_fallthru
    _
  // Predicated region
  $region10: #{lr_hyperlearnfc_forward.1} parent=0 // pred_check
    _
  $region11: #{lr_hyperlearnfc_forward.1} parent=0 // pred_check_branch
    %14 = sbr.rel (0) target = $region13
  $region12: #{lr_hyperlearnfc_forward.1} parent=0 // pred_region
    _
  $region13: #{lr_hyperlearnfc_forward.1} parent=0 // pred_fallthru
    _
  // Predicated region
  $region14: #{lr_hyperlearnfc_forward.1} parent=0 // pred_check
    _
  $region15: #{lr_hyperlearnfc_forward.1} parent=0 // pred_check_branch
    %16 = sbr.rel (0) target = $region17
  $region16: #{lr_hyperlearnfc_forward.1} parent=0 // pred_region
    _
  $region17: #{lr_hyperlearnfc_forward.1} parent=0 // pred_fallthru
    _
  %v17 = vld [vmem:[%s0] sm:$0xff]
  %v18 = vld [vmem:[%s0 + $0x8] sm:$0xff]
  %v19 = vld [vmem:[%s0 + $0x10] sm:$0xff]
  %v20 = vld [vmem:[%s0 + $0x18] sm:$0xff]
  %v21 = vld [vmem:[%s1] sm:$0xff]
  %v22 = vld [vmem:[%s1 + $0x8] sm:$0xff]
  %v23 = vld [vmem:[%s1 + $0x10] sm:$0xff]
  %v24 = vld [vmem:[%s1 + $0x18] sm:$0xff]
  %v25 = vld [vmem:[%s1 + $0x20] sm:$0xf]
  %vm26 = vcmask 293888
  %v28 = vsel %vm26, %v17, 0
  %v31 = vsel %vm26, %v18, 0
  %v34 = vsel %vm26, %v19, 0
  %v37 = vsel %vm26, %v20, 0
  %vm39 = vcmask 1043456
  %v41 = vsel %vm39, %v25, 0
  %43 = vmatprep.subr.mxu0 0.0
  %44 = vmatpush1.msra.mxu0 %v21
  %45 = vmatprep.subr.mxu0 0.0
  %46 = vmatpush1.msra.mxu0 %v22
  %47 = vmatprep.subr.mxu0 0.0
  %48 = vmatpush1.msra.mxu0 %v23
  %49 = vmatprep.subr.mxu0 0.0
  %50 = vmatpush1.msra.mxu0 %v24
  %51 = vmatprep.subr.mxu0 0.0
  %52 = vmatpush1.msra.mxu0 %v41
  %53 = vmatprep.subr.mxu0 0.0
  %54 = vmatpush1.msra.mxu0 0.0
  %55 = vmatprep.subr.mxu0 0.0
  %56 = vmatpush1.msra.mxu0 0.0
  %57 = vmatprep.subr.mxu0 0.0
  %58 = vmatpush1.msra.mxu0 0.0
  %59 = vmatprep.subr.mxu0 0.0
  %60 = vmatpush1.msra.mxu0 0.0
  %61 = vmatprep.subr.mxu0 0.0
  %62 = vmatpush1.msra.mxu0 0.0
  %63 = vmatprep.subr.mxu0 0.0
  %64 = vmatpush1.msra.mxu0 0.0
  %65 = vmatprep.subr.mxu0 0.0
  %66 = vmatpush1.msra.mxu0 0.0
  %67 = vmatprep.subr.mxu0 0.0
  %68 = vmatpush1.msra.mxu0 0.0
  %69 = vmatprep.subr.mxu0 0.0
  %70 = vmatpush1.msra.mxu0 0.0
  %71 = vmatprep.subr.mxu0 0.0
  %72 = vmatpush1.msra.mxu0 0.0
  %73 = vmatprep.subr.mxu0 0.0
  %74 = vmatpush1.msra.mxu0 0.0
  %75 = vmatprep.subr.mxu0 0.0
  %76 = vmatpush1.msra.mxu0 0.0
  %77 = vmatprep.subr.mxu0 0.0
  %78 = vmatpush1.msra.mxu0 0.0
  %79 = vmatprep.subr.mxu0 0.0
  %80 = vmatpush1.msra.mxu0 0.0
  %81 = vmatprep.subr.mxu0 0.0
  %82 = vmatpush1.msra.mxu0 0.0
  %83 = vmatprep.subr.mxu0 0.0
  %84 = vmatpush1.msra.mxu0 0.0
  %85 = vmatprep.subr.mxu0 0.0
  %86 = vmatpush1.msra.mxu0 0.0
  %87 = vmatprep.subr.mxu0 0.0
  %88 = vmatpush1.msra.mxu0 0.0
  %89 = vmatprep.subr.mxu0 0.0
  %90 = vmatpush1.msra.mxu0 0.0
  %91 = vmatprep.subr.mxu0 0.0
  %92 = vmatpush1.msra.mxu0 0.0
  %93 = vmatprep.subr.mxu0 0.0
  %94 = vmatpush1.msra.mxu0 0.0
  %95 = vmatprep.subr.mxu0 0.0
  %96 = vmatpush1.msra.mxu0 0.0
  %97 = vmatprep.subr.mxu0 0.0
  %98 = vmatpush1.msra.mxu0 0.0
  %99 = vmatprep.subr.mxu0 0.0
  %100 = vmatpush1.msra.mxu0 0.0
  %101 = vmatprep.subr.mxu0 0.0
  %102 = vmatpush1.msra.mxu0 0.0
  %103 = vmatprep.subr.mxu0 0.0
  %104 = vmatpush1.msra.mxu0 0.0
  %105 = vmatprep.subr.mxu0 0.0
  %106 = vmatpush1.msra.mxu0 0.0
  %107 = vmatprep.mubr.f32.mxu0 0.0
  %108 = vmatmul.mubr.f32.gmra.mrb[0].mxu0 %v28
  %v109 = vpop.f32.mrb[0].mxu0
  %v110 = vadd.f32 0.0, %v109
  %v111 = vpop.f32.mrb[0].mxu0
  %112 = vmatprep.mubr.f32.mxu0 0.0
  %113 = vmatmul.mubr.f32.gmra.mrb[0].mxu0 %v31
  %v114 = vpop.f32.mrb[0].mxu0
  %v115 = vadd.f32 0.0, %v114
  %v116 = vpop.f32.mrb[0].mxu0
  %117 = vmatprep.mubr.f32.mxu0 0.0
  %118 = vmatmul.mubr.f32.gmra.mrb[0].mxu0 %v34
  %v119 = vpop.f32.mrb[0].mxu0
  %v120 = vadd.f32 0.0, %v119
  %v121 = vpop.f32.mrb[0].mxu0
  %122 = vmatprep.mubr.f32.mxu0 0.0
  %123 = vmatmul.mubr.f32.gmra.mrb[0].mxu0 %v37
  %v124 = vpop.f32.mrb[0].mxu0
  %v125 = vadd.f32 0.0, %v124
  %v126 = vpop.f32.mrb[0].mxu0
  %127 = vdwg.mxu0
  %v128 = vld [vmem:[%s3] sm:$0xff]
  %v129 = vld [vmem:[%s3 + $0x8] sm:$0xff]
  %v130 = vld [vmem:[%s2] sm:$0xff]
  %v131 = vld [vmem:[%s2 + $0x8] sm:$0xff]
  %133 = vset.pattern.permute.xlu0 0
  %134 = vperm.xlu0 %133, %v110
  %v135 = vpop.permute.xlu0 %134
  %138 = vset.pattern.permute.xlu0 0
  %139 = vperm.xlu0 %138, %v115
  %v140 = vpop.permute.xlu0 %139
  %v142 = vmul.f32 %v135, %v130
  %v143 = vmul.f32 %v140, %v131
  %v144 = vadd.f32 %v128, %v142
  %v145 = vadd.f32 %v129, %v143
  %s146 = scalar_lea.vmem %s2, 16
  %v147 = vld [vmem:[%s146] sm:$0xff]
  %v148 = vld [vmem:[%s146 + $0x8] sm:$0xff]
  %149 = vset.pattern.permute.xlu0 1
  %150 = vperm.xlu0 %149, %v110
  %v151 = vpop.permute.xlu0 %150
  %153 = vset.pattern.permute.xlu0 1
  %154 = vperm.xlu0 %153, %v115
  %v155 = vpop.permute.xlu0 %154
  %v157 = vmul.f32 %v151, %v147
  %v158 = vmul.f32 %v155, %v148
  %v159 = vadd.f32 %v144, %v157
  %v160 = vadd.f32 %v145, %v158
  %s161 = scalar_lea.vmem %s2, 32
  %v162 = vld [vmem:[%s161] sm:$0xff]
  %v163 = vld [vmem:[%s161 + $0x8] sm:$0xff]
  %164 = vset.pattern.permute.xlu0 2
  %165 = vperm.xlu0 %164, %v110
  %v166 = vpop.permute.xlu0 %165
  %168 = vset.pattern.permute.xlu0 2
  %169 = vperm.xlu0 %168, %v115
  %v170 = vpop.permute.xlu0 %169
  %v172 = vmul.f32 %v166, %v162
  %v173 = vmul.f32 %v170, %v163
  %v174 = vadd.f32 %v159, %v172
  %v175 = vadd.f32 %v160, %v173
  %s176 = scalar_lea.vmem %s2, 48
  %v177 = vld [vmem:[%s176] sm:$0xff]
  %v178 = vld [vmem:[%s176 + $0x8] sm:$0xff]
  %179 = vset.pattern.permute.xlu0 3
  %180 = vperm.xlu0 %179, %v110
  %v181 = vpop.permute.xlu0 %180
  %183 = vset.pattern.permute.xlu0 3
  %184 = vperm.xlu0 %183, %v115
  %v185 = vpop.permute.xlu0 %184
  %v187 = vmul.f32 %v181, %v177
  %v188 = vmul.f32 %v185, %v178
  %v189 = vadd.f32 %v174, %v187
  %v190 = vadd.f32 %v175, %v188
  %s191 = scalar_lea.vmem %s2, 64
  %v192 = vld [vmem:[%s191] sm:$0xff]
  %v193 = vld [vmem:[%s191 + $0x8] sm:$0xff]
  %194 = vset.pattern.permute.xlu0 4
  %195 = vperm.xlu0 %194, %v110
  %v196 = vpop.permute.xlu0 %195
  %198 = vset.pattern.permute.xlu0 4
  %199 = vperm.xlu0 %198, %v115
  %v200 = vpop.permute.xlu0 %199
  %v202 = vmul.f32 %v196, %v192
  %v203 = vmul.f32 %v200, %v193
  %v204 = vadd.f32 %v189, %v202
  %v205 = vadd.f32 %v190, %v203
  %s206 = scalar_lea.vmem %s2, 80
  %v207 = vld [vmem:[%s206] sm:$0xff]
  %v208 = vld [vmem:[%s206 + $0x8] sm:$0xff]
  %209 = vset.pattern.permute.xlu0 5
  %210 = vperm.xlu0 %209, %v110
  %v211 = vpop.permute.xlu0 %210
  %213 = vset.pattern.permute.xlu0 5
  %214 = vperm.xlu0 %213, %v115
  %v215 = vpop.permute.xlu0 %214
  %v217 = vmul.f32 %v211, %v207
  %v218 = vmul.f32 %v215, %v208
  %v219 = vadd.f32 %v204, %v217
  %v220 = vadd.f32 %v205, %v218
  %s221 = scalar_lea.vmem %s2, 96
  %v222 = vld [vmem:[%s221] sm:$0xff]
  %v223 = vld [vmem:[%s221 + $0x8] sm:$0xff]
  %224 = vset.pattern.permute.xlu0 6
  %225 = vperm.xlu0 %224, %v110
  %v226 = vpop.permute.xlu0 %225
  %228 = vset.pattern.permute.xlu0 6
  %229 = vperm.xlu0 %228, %v115
  %v230 = vpop.permute.xlu0 %229
  %v232 = vmul.f32 %v226, %v222
  %v233 = vmul.f32 %v230, %v223
  %v234 = vadd.f32 %v219, %v232
  %v235 = vadd.f32 %v220, %v233
  %s236 = scalar_lea.vmem %s2, 112
  %v237 = vld [vmem:[%s236] sm:$0xff]
  %v238 = vld [vmem:[%s236 + $0x8] sm:$0xff]
  %239 = vset.pattern.permute.xlu0 7
  %240 = vperm.xlu0 %239, %v110
  %v241 = vpop.permute.xlu0 %240
  %243 = vset.pattern.permute.xlu0 7
  %244 = vperm.xlu0 %243, %v115
  %v245 = vpop.permute.xlu0 %244
  %v247 = vmul.f32 %v241, %v237
  %v248 = vmul.f32 %v245, %v238
  %v249 = vadd.f32 %v234, %v247
  %v250 = vadd.f32 %v235, %v248
  %s251 = scalar_lea.vmem %s2, 128
  %v252 = vld [vmem:[%s251] sm:$0xff]
  %v253 = vld [vmem:[%s251 + $0x8] sm:$0xff]
  %254 = vset.pattern.permute.xlu0 8
  %255 = vperm.xlu0 %254, %v110
  %v256 = vpop.permute.xlu0 %255
  %258 = vset.pattern.permute.xlu0 8
  %259 = vperm.xlu0 %258, %v115
  %v260 = vpop.permute.xlu0 %259
  %v262 = vmul.f32 %v256, %v252
  %v263 = vmul.f32 %v260, %v253
  %v264 = vadd.f32 %v249, %v262
  %v265 = vadd.f32 %v250, %v263
  %s266 = scalar_lea.vmem %s2, 144
  %v267 = vld [vmem:[%s266] sm:$0xff]
  %v268 = vld [vmem:[%s266 + $0x8] sm:$0xff]
  %269 = vset.pattern.permute.xlu0 9
  %270 = vperm.xlu0 %269, %v110
  %v271 = vpop.permute.xlu0 %270
  %273 = vset.pattern.permute.xlu0 9
  %274 = vperm.xlu0 %273, %v115
  %v275 = vpop.permute.xlu0 %274
  %v277 = vmul.f32 %v271, %v267
  %v278 = vmul.f32 %v275, %v268
  %v279 = vadd.f32 %v264, %v277
  %v280 = vadd.f32 %v265, %v278
  %s281 = scalar_lea.vmem %s2, 160
  %v282 = vld [vmem:[%s281] sm:$0xff]
  %v283 = vld [vmem:[%s281 + $0x8] sm:$0xff]
  %284 = vset.pattern.permute.xlu0 10
  %285 = vperm.xlu0 %284, %v110
  %v286 = vpop.permute.xlu0 %285
  %288 = vset.pattern.permute.xlu0 10
  %289 = vperm.xlu0 %288, %v115
  %v290 = vpop.permute.xlu0 %289
  %v292 = vmul.f32 %v286, %v282
  %v293 = vmul.f32 %v290, %v283
  %v294 = vadd.f32 %v279, %v292
  %v295 = vadd.f32 %v280, %v293
  %s296 = scalar_lea.vmem %s2, 176
  %v297 = vld [vmem:[%s296] sm:$0xff]
  %v298 = vld [vmem:[%s296 + $0x8] sm:$0xff]
  %299 = vset.pattern.permute.xlu0 11
  %300 = vperm.xlu0 %299, %v110
  %v301 = vpop.permute.xlu0 %300
  %303 = vset.pattern.permute.xlu0 11
  %304 = vperm.xlu0 %303, %v115
  %v305 = vpop.permute.xlu0 %304
  %v307 = vmul.f32 %v301, %v297
  %v308 = vmul.f32 %v305, %v298
  %v309 = vadd.f32 %v294, %v307
  %v310 = vadd.f32 %v295, %v308
  %s311 = scalar_lea.vmem %s2, 192
  %v312 = vld [vmem:[%s311] sm:$0xff]
  %v313 = vld [vmem:[%s311 + $0x8] sm:$0xff]
  %314 = vset.pattern.permute.xlu0 12
  %315 = vperm.xlu0 %314, %v110
  %v316 = vpop.permute.xlu0 %315
  %318 = vset.pattern.permute.xlu0 12
  %319 = vperm.xlu0 %318, %v115
  %v320 = vpop.permute.xlu0 %319
  %v322 = vmul.f32 %v316, %v312
  %v323 = vmul.f32 %v320, %v313
  %v324 = vadd.f32 %v309, %v322
  %v325 = vadd.f32 %v310, %v323
  %s326 = scalar_lea.vmem %s2, 208
  %v327 = vld [vmem:[%s326] sm:$0xff]
  %v328 = vld [vmem:[%s326 + $0x8] sm:$0xff]
  %329 = vset.pattern.permute.xlu0 13
  %330 = vperm.xlu0 %329, %v110
  %v331 = vpop.permute.xlu0 %330
  %333 = vset.pattern.permute.xlu0 13
  %334 = vperm.xlu0 %333, %v115
  %v335 = vpop.permute.xlu0 %334
  %v337 = vmul.f32 %v331, %v327
  %v338 = vmul.f32 %v335, %v328
  %v339 = vadd.f32 %v324, %v337
  %v340 = vadd.f32 %v325, %v338
  %s341 = scalar_lea.vmem %s2, 224
  %v342 = vld [vmem:[%s341] sm:$0xff]
  %v343 = vld [vmem:[%s341 + $0x8] sm:$0xff]
  %344 = vset.pattern.permute.xlu0 14
  %345 = vperm.xlu0 %344, %v110
  %v346 = vpop.permute.xlu0 %345
  %348 = vset.pattern.permute.xlu0 14
  %349 = vperm.xlu0 %348, %v115
  %v350 = vpop.permute.xlu0 %349
  %v352 = vmul.f32 %v346, %v342
  %v353 = vmul.f32 %v350, %v343
  %v354 = vadd.f32 %v339, %v352
  %v355 = vadd.f32 %v340, %v353
  %s356 = scalar_lea.vmem %s2, 240
  %v357 = vld [vmem:[%s356] sm:$0xff]
  %v358 = vld [vmem:[%s356 + $0x8] sm:$0xff]
  %359 = vset.pattern.permute.xlu0 15
  %360 = vperm.xlu0 %359, %v110
  %v361 = vpop.permute.xlu0 %360
  %363 = vset.pattern.permute.xlu0 15
  %364 = vperm.xlu0 %363, %v115
  %v365 = vpop.permute.xlu0 %364
  %v367 = vmul.f32 %v361, %v357
  %v368 = vmul.f32 %v365, %v358
  %v369 = vadd.f32 %v354, %v367
  %v370 = vadd.f32 %v355, %v368
  %vm371 = vcmask 130048
  %372 = vst.msk [vmem:[%s4] sm:$0xff] %vm371, %v369
  %373 = vst.msk [vmem:[%s4 + $0x8] sm:$0xff] %vm371, %v370
  %v374 = vld [vmem:[%s2] sm:$0xff]
  %v375 = vld [vmem:[%s2 + $0x8] sm:$0xff]
  %377 = vset.pattern.permute.xlu0 0
  %378 = vperm.xlu0 %377, %v120
  %v379 = vpop.permute.xlu0 %378
  %382 = vset.pattern.permute.xlu0 0
  %383 = vperm.xlu0 %382, %v125
  %v384 = vpop.permute.xlu0 %383
  %v386 = vmul.f32 %v379, %v374
  %v387 = vmul.f32 %v384, %v375
  %v388 = vadd.f32 %v128, %v386
  %v389 = vadd.f32 %v129, %v387
  %v390 = vld [vmem:[%s146] sm:$0xff]
  %v391 = vld [vmem:[%s146 + $0x8] sm:$0xff]
  %392 = vset.pattern.permute.xlu0 1
  %393 = vperm.xlu0 %392, %v120
  %v394 = vpop.permute.xlu0 %393
  %396 = vset.pattern.permute.xlu0 1
  %397 = vperm.xlu0 %396, %v125
  %v398 = vpop.permute.xlu0 %397
  %v400 = vmul.f32 %v394, %v390
  %v401 = vmul.f32 %v398, %v391
  %v402 = vadd.f32 %v388, %v400
  %v403 = vadd.f32 %v389, %v401
  %v404 = vld [vmem:[%s161] sm:$0xff]
  %v405 = vld [vmem:[%s161 + $0x8] sm:$0xff]
  %406 = vset.pattern.permute.xlu0 2
  %407 = vperm.xlu0 %406, %v120
  %v408 = vpop.permute.xlu0 %407
  %410 = vset.pattern.permute.xlu0 2
  %411 = vperm.xlu0 %410, %v125
  %v412 = vpop.permute.xlu0 %411
  %v414 = vmul.f32 %v408, %v404
  %v415 = vmul.f32 %v412, %v405
  %v416 = vadd.f32 %v402, %v414
  %v417 = vadd.f32 %v403, %v415
  %v418 = vld [vmem:[%s176] sm:$0xff]
  %v419 = vld [vmem:[%s176 + $0x8] sm:$0xff]
  %420 = vset.pattern.permute.xlu0 3
  %421 = vperm.xlu0 %420, %v120
  %v422 = vpop.permute.xlu0 %421
  %424 = vset.pattern.permute.xlu0 3
  %425 = vperm.xlu0 %424, %v125
  %v426 = vpop.permute.xlu0 %425
  %v428 = vmul.f32 %v422, %v418
  %v429 = vmul.f32 %v426, %v419
  %v430 = vadd.f32 %v416, %v428
  %v431 = vadd.f32 %v417, %v429
  %v432 = vld [vmem:[%s191] sm:$0xff]
  %v433 = vld [vmem:[%s191 + $0x8] sm:$0xff]
  %434 = vset.pattern.permute.xlu0 4
  %435 = vperm.xlu0 %434, %v120
  %v436 = vpop.permute.xlu0 %435
  %438 = vset.pattern.permute.xlu0 4
  %439 = vperm.xlu0 %438, %v125
  %v440 = vpop.permute.xlu0 %439
  %v442 = vmul.f32 %v436, %v432
  %v443 = vmul.f32 %v440, %v433
  %v444 = vadd.f32 %v430, %v442
  %v445 = vadd.f32 %v431, %v443
  %v446 = vld [vmem:[%s206] sm:$0xff]
  %v447 = vld [vmem:[%s206 + $0x8] sm:$0xff]
  %448 = vset.pattern.permute.xlu0 5
  %449 = vperm.xlu0 %448, %v120
  %v450 = vpop.permute.xlu0 %449
  %452 = vset.pattern.permute.xlu0 5
  %453 = vperm.xlu0 %452, %v125
  %v454 = vpop.permute.xlu0 %453
  %v456 = vmul.f32 %v450, %v446
  %v457 = vmul.f32 %v454, %v447
  %v458 = vadd.f32 %v444, %v456
  %v459 = vadd.f32 %v445, %v457
  %v460 = vld [vmem:[%s221] sm:$0xff]
  %v461 = vld [vmem:[%s221 + $0x8] sm:$0xff]
  %462 = vset.pattern.permute.xlu0 6
  %463 = vperm.xlu0 %462, %v120
  %v464 = vpop.permute.xlu0 %463
  %466 = vset.pattern.permute.xlu0 6
  %467 = vperm.xlu0 %466, %v125
  %v468 = vpop.permute.xlu0 %467
  %v470 = vmul.f32 %v464, %v460
  %v471 = vmul.f32 %v468, %v461
  %v472 = vadd.f32 %v458, %v470
  %v473 = vadd.f32 %v459, %v471
  %v474 = vld [vmem:[%s236] sm:$0xff]
  %v475 = vld [vmem:[%s236 + $0x8] sm:$0xff]
  %476 = vset.pattern.permute.xlu0 7
  %477 = vperm.xlu0 %476, %v120
  %v478 = vpop.permute.xlu0 %477
  %480 = vset.pattern.permute.xlu0 7
  %481 = vperm.xlu0 %480, %v125
  %v482 = vpop.permute.xlu0 %481
  %v484 = vmul.f32 %v478, %v474
  %v485 = vmul.f32 %v482, %v475
  %v486 = vadd.f32 %v472, %v484
  %v487 = vadd.f32 %v473, %v485
  %v488 = vld [vmem:[%s251] sm:$0xff]
  %v489 = vld [vmem:[%s251 + $0x8] sm:$0xff]
  %490 = vset.pattern.permute.xlu0 8
  %491 = vperm.xlu0 %490, %v120
  %v492 = vpop.permute.xlu0 %491
  %494 = vset.pattern.permute.xlu0 8
  %495 = vperm.xlu0 %494, %v125
  %v496 = vpop.permute.xlu0 %495
  %v498 = vmul.f32 %v492, %v488
  %v499 = vmul.f32 %v496, %v489
  %v500 = vadd.f32 %v486, %v498
  %v501 = vadd.f32 %v487, %v499
  %v502 = vld [vmem:[%s266] sm:$0xff]
  %v503 = vld [vmem:[%s266 + $0x8] sm:$0xff]
  %504 = vset.pattern.permute.xlu0 9
  %505 = vperm.xlu0 %504, %v120
  %v506 = vpop.permute.xlu0 %505
  %508 = vset.pattern.permute.xlu0 9
  %509 = vperm.xlu0 %508, %v125
  %v510 = vpop.permute.xlu0 %509
  %v512 = vmul.f32 %v506, %v502
  %v513 = vmul.f32 %v510, %v503
  %v514 = vadd.f32 %v500, %v512
  %v515 = vadd.f32 %v501, %v513
  %v516 = vld [vmem:[%s281] sm:$0xff]
  %v517 = vld [vmem:[%s281 + $0x8] sm:$0xff]
  %518 = vset.pattern.permute.xlu0 10
  %519 = vperm.xlu0 %518, %v120
  %v520 = vpop.permute.xlu0 %519
  %522 = vset.pattern.permute.xlu0 10
  %523 = vperm.xlu0 %522, %v125
  %v524 = vpop.permute.xlu0 %523
  %v526 = vmul.f32 %v520, %v516
  %v527 = vmul.f32 %v524, %v517
  %v528 = vadd.f32 %v514, %v526
  %v529 = vadd.f32 %v515, %v527
  %v530 = vld [vmem:[%s296] sm:$0xff]
  %v531 = vld [vmem:[%s296 + $0x8] sm:$0xff]
  %532 = vset.pattern.permute.xlu0 11
  %533 = vperm.xlu0 %532, %v120
  %v534 = vpop.permute.xlu0 %533
  %536 = vset.pattern.permute.xlu0 11
  %537 = vperm.xlu0 %536, %v125
  %v538 = vpop.permute.xlu0 %537
  %v540 = vmul.f32 %v534, %v530
  %v541 = vmul.f32 %v538, %v531
  %v542 = vadd.f32 %v528, %v540
  %v543 = vadd.f32 %v529, %v541
  %v544 = vld [vmem:[%s311] sm:$0xff]
  %v545 = vld [vmem:[%s311 + $0x8] sm:$0xff]
  %546 = vset.pattern.permute.xlu0 12
  %547 = vperm.xlu0 %546, %v120
  %v548 = vpop.permute.xlu0 %547
  %550 = vset.pattern.permute.xlu0 12
  %551 = vperm.xlu0 %550, %v125
  %v552 = vpop.permute.xlu0 %551
  %v554 = vmul.f32 %v548, %v544
  %v555 = vmul.f32 %v552, %v545
  %v556 = vadd.f32 %v542, %v554
  %v557 = vadd.f32 %v543, %v555
  %v558 = vld [vmem:[%s326] sm:$0xff]
  %v559 = vld [vmem:[%s326 + $0x8] sm:$0xff]
  %560 = vset.pattern.permute.xlu0 13
  %561 = vperm.xlu0 %560, %v120
  %v562 = vpop.permute.xlu0 %561
  %564 = vset.pattern.permute.xlu0 13
  %565 = vperm.xlu0 %564, %v125
  %v566 = vpop.permute.xlu0 %565
  %v568 = vmul.f32 %v562, %v558
  %v569 = vmul.f32 %v566, %v559
  %v570 = vadd.f32 %v556, %v568
  %v571 = vadd.f32 %v557, %v569
  %v572 = vld [vmem:[%s341] sm:$0xff]
  %v573 = vld [vmem:[%s341 + $0x8] sm:$0xff]
  %574 = vset.pattern.permute.xlu0 14
  %575 = vperm.xlu0 %574, %v120
  %v576 = vpop.permute.xlu0 %575
  %578 = vset.pattern.permute.xlu0 14
  %579 = vperm.xlu0 %578, %v125
  %v580 = vpop.permute.xlu0 %579
  %v582 = vmul.f32 %v576, %v572
  %v583 = vmul.f32 %v580, %v573
  %v584 = vadd.f32 %v570, %v582
  %v585 = vadd.f32 %v571, %v583
  %v586 = vld [vmem:[%s356] sm:$0xff]
  %v587 = vld [vmem:[%s356 + $0x8] sm:$0xff]
  %588 = vset.pattern.permute.xlu0 15
  %589 = vperm.xlu0 %588, %v120
  %v590 = vpop.permute.xlu0 %589
  %592 = vset.pattern.permute.xlu0 15
  %593 = vperm.xlu0 %592, %v125
  %v594 = vpop.permute.xlu0 %593
  %v596 = vmul.f32 %v590, %v586
  %v597 = vmul.f32 %v594, %v587
  %v598 = vadd.f32 %v584, %v596
  %v599 = vadd.f32 %v585, %v597
  %s600 = scalar_lea.vmem %s4, 16
  %601 = vst.msk [vmem:[%s600] sm:$0xff] %vm371, %v598
  %602 = vst.msk [vmem:[%s600 + $0x8] sm:$0xff] %vm371, %v599
  // Predicated region
  $region18: #{lr_hyperlearnfc_forward.1} parent=0 // pred_check
    _
  $region19: #{lr_hyperlearnfc_forward.1} parent=0 // pred_check_branch
    %604 = sbr.rel (0) target = $region21
  $region20: #{lr_hyperlearnfc_forward.1} parent=0 // pred_region
    _
  $region21: #{lr_hyperlearnfc_forward.1} parent=0 // pred_fallthru
    _
  // Predicated region
  $region22: #{lr_hyperlearnfc_forward.1} parent=0 // pred_check
    _
  $region23: #{lr_hyperlearnfc_forward.1} parent=0 // pred_check_branch
    %606 = sbr.rel (0) target = $region25
  $region24: #{lr_hyperlearnfc_forward.1} parent=0 // pred_region
    _
  $region25: #{lr_hyperlearnfc_forward.1} parent=0 // pred_fallthru
    _

</llo_original>
